<compile_context>
chip_gen: v5e
topology: v5e:2x2
jax: 0.10.0
libtpu: 0.0.40
codegen_flags: <defaults>
</compile_context>

<pallas_src>
import functools
import math

import jax
import jax.numpy as jnp
from jax.experimental import pallas as pl
from jax.experimental.pallas import tpu as pltpu


def _round_up(a: int, b: int) -> int:
    return (a + b - 1) // b * b


def _rmsnorm_linear_kernel(x_ref, g_ref, w_ref, b_ref, o_ref, *, inv_in, eps):
    # x_ref: (tm, IN) row tile        g_ref: (1, IN)  RMSNorm gamma
    # w_ref: (IN, tn) weight tile     b_ref: (1, tn)  bias tile
    # o_ref: (tm, tn) output tile
    x = x_ref[...]
    xf = x.astype(jnp.float32)

    # RMSNorm: x * rsqrt(mean(x^2, -1) + eps) * gamma
    # sum + hoisted (1/IN) constant instead of mean; reduce -> XLU, rsqrt -> EUP,
    # exactly two VPU multiplies per element (x*inv_rms, *gamma).
    ss = jnp.sum(xf * xf, axis=-1, keepdims=True)
    inv_rms = jax.lax.rsqrt(ss * inv_in + eps)
    xn = (xf * inv_rms * g_ref[...].astype(jnp.float32)).astype(x.dtype)

    # Linear: xn @ W_tile + b_tile, f32 accumulation on the MXU (bf16 inputs stay bf16).
    y = jnp.dot(xn, w_ref[...], preferred_element_type=jnp.float32)
    y = y + b_ref[...].astype(jnp.float32)
    o_ref[...] = y.astype(o_ref.dtype)


@functools.partial(jax.jit, static_argnames=("tm", "tn"))
def rmsnorm_linear(x, gamma, weight, bias, *, tm=256, tn=512):
    """x: (..., IN); gamma: (IN,); weight: (OUT, IN); bias: (OUT,)."""
    *lead, IN = x.shape
    OUT = weight.shape[0]
    M = math.prod(lead) if lead else 1

    # torch.nn.RMSNorm(eps=None) uses torch.finfo(x.dtype).eps
    eps = float(jnp.finfo(x.dtype).eps)
    inv_in = 1.0 / IN

    x2d = x.reshape(M, IN)

    # Row tiling: big row tiles; 16-multiple sublane alignment also covers bf16 packing.
    tm_eff = min(tm, _round_up(M, 16))
    M_pad = _round_up(M, tm_eff)
    if M_pad != M:
        x2d = jnp.pad(x2d, ((0, M_pad - M), (0, 0)))

    # OUT tiling: lane-dense (multiple of 128) column tiles of W^T.
    tn_eff = min(tn, _round_up(OUT, 128))
    OUT_pad = _round_up(OUT, tn_eff)
    wT = weight.T  # (IN, OUT)
    if OUT_pad != OUT:
        wT = jnp.pad(wT, ((0, 0), (0, OUT_pad - OUT)))
        b2d = jnp.pad(bias, (0, OUT_pad - OUT)).reshape(1, OUT_pad)
    else:
        b2d = bias.reshape(1, OUT_pad)
    g2d = gamma.reshape(1, IN)

    n_j = OUT_pad // tn_eff   # weight-column tiles (outer grid axis)
    n_i = M_pad // tm_eff     # row tiles (inner grid axis)

    kernel = functools.partial(_rmsnorm_linear_kernel, inv_in=inv_in, eps=eps)

    x_bytes = x2d.dtype.itemsize
    w_bytes = wT.dtype.itemsize
    cost = pl.CostEstimate(
        flops=2 * M_pad * IN * OUT_pad,
        transcendentals=M_pad,
        bytes_accessed=(n_j * M_pad * IN * x_bytes          # x streamed once per OUT tile
                        + IN * OUT_pad * w_bytes            # weight streamed exactly once
                        + M_pad * OUT_pad * x_bytes),       # output written once
    )

    out2d = pl.pallas_call(
        kernel,
        out_shape=jax.ShapeDtypeStruct((M_pad, OUT_pad), x.dtype),
        grid_spec=pltpu.PrefetchScalarGridSpec(
            num_scalar_prefetch=0,
            grid=(n_j, n_i),  # j (OUT tiles) outer, i (row tiles) inner
            in_specs=[
                pl.BlockSpec((tm_eff, IN), lambda j, i: (i, 0)),   # x row tile
                pl.BlockSpec((1, IN), lambda j, i: (0, 0)),        # gamma (replicated)
                pl.BlockSpec((IN, tn_eff), lambda j, i: (0, j)),   # W^T column tile
                pl.BlockSpec((1, tn_eff), lambda j, i: (0, j)),    # bias tile
            ],
            out_specs=pl.BlockSpec((tm_eff, tn_eff), lambda j, i: (i, j)),
        ),
        compiler_params=pltpu.CompilerParams(
            dimension_semantics=("parallel", "parallel"),
            vmem_limit_bytes=48 << 20,   # fits v7x's 64 MiB/TC with double-buffer headroom
        ),
        cost_estimate=cost,
    )(x2d, g2d, wT, b2d)

    out2d = out2d[:M, :OUT]
    return out2d.reshape(*lead, OUT)


def _reference(x, gamma, weight, bias):
    eps = jnp.finfo(x.dtype).eps
    x32 = x.astype(jnp.float32)
    ms = jnp.mean(x32 * x32, axis=-1, keepdims=True)
    xn = x32 * jax.lax.rsqrt(ms + eps) * gamma.astype(jnp.float32)
    y = xn @ weight.T.astype(jnp.float32) + bias.astype(jnp.float32)
    return y.astype(x.dtype)


if __name__ == "__main__":
    B, S, IN, OUT = 2, 8, 32, 64

    key = jax.random.PRNGKey(0)
    kx, kw, kb = jax.random.split(key, 3)

    x = jax.random.normal(kx, (B, S, IN), dtype=jnp.float32)
    # nn.RMSNorm initializes weight to ones
    gamma = jnp.ones((IN,), dtype=jnp.float32)
    # nn.Linear init: uniform(-1/sqrt(IN), 1/sqrt(IN)) for weight and bias
    bound = 1.0 / (IN ** 0.5)
    weight = jax.random.uniform(kw, (OUT, IN), dtype=jnp.float32,
                                minval=-bound, maxval=bound)
    bias = jax.random.uniform(kb, (OUT,), dtype=jnp.float32,
                              minval=-bound, maxval=bound)

    out = jax.block_until_ready(rmsnorm_linear(x, gamma, weight, bias))

    ref = _reference(x, gamma, weight, bias)
    assert out.shape == (B, S, OUT)
    assert jnp.allclose(out, ref, atol=1e-4, rtol=1e-4), "mismatch vs reference"

    print("KERNEL_OK")
</pallas_src>

<mosaic_0001>
module attributes {stable_mosaic.version = 11 : i64} {
  func.func @_rmsnorm_linear_kernel(%arg0: i32, %arg1: i32, %arg2: memref<16x32xf32, #tpu.memory_space<vmem>>, %arg3: memref<1x32xf32, #tpu.memory_space<vmem>>, %arg4: memref<32x128xf32, #tpu.memory_space<vmem>>, %arg5: memref<1x128xf32, #tpu.memory_space<vmem>>, %arg6: memref<16x128xf32, #tpu.memory_space<vmem>>) attributes {dimension_semantics = [#tpu.dimension_semantics<parallel>, #tpu.dimension_semantics<parallel>], iteration_bounds = array<i64: 1, 1>, scalar_prefetch = 0 : i64, scratch_operands = 0 : i64, tpu.core_type = #tpu.core_type<tc>, window_params = [{transform_indices = @transform_0, window_bounds = array<i64: 16, 32>}, {pipeline_mode = #tpu.pipeline_mode<synchronous>, transform_indices = @transform_1, window_bounds = array<i64: 1, 32>}, {transform_indices = @transform_2, window_bounds = array<i64: 32, 128>}, {transform_indices = @transform_3, window_bounds = array<i64: 1, 128>}, {transform_indices = @transform_4, window_bounds = array<i64: 16, 128>}]} {
    %c0 = arith.constant 0 : index
    %c0_0 = arith.constant 0 : index
    %0 = vector.load %arg2[%c0, %c0_0] : memref<16x32xf32, #tpu.memory_space<vmem>>, vector<16x32xf32>
    %1 = arith.mulf %0, %0 : vector<16x32xf32>
    %cst = arith.constant dense<0.000000e+00> : vector<16xf32>
    %2 = vector.multi_reduction <add>, %1, %cst [1] : vector<16x32xf32> to vector<16xf32>
    %3 = vector.shape_cast %2 : vector<16xf32> to vector<16x1xf32>
    %cst_1 = arith.constant 3.125000e-02 : f32
    %4 = vector.broadcast %cst_1 : f32 to vector<16x1xf32>
    %5 = arith.mulf %3, %4 : vector<16x1xf32>
    %cst_2 = arith.constant 1.1920929E-7 : f32
    %6 = vector.broadcast %cst_2 : f32 to vector<16x1xf32>
    %7 = arith.addf %5, %6 : vector<16x1xf32>
    %8 = math.rsqrt %7 : vector<16x1xf32>
    %9 = vector.broadcast %8 : vector<16x1xf32> to vector<16x32xf32>
    %10 = arith.mulf %0, %9 : vector<16x32xf32>
    %c0_3 = arith.constant 0 : index
    %c0_4 = arith.constant 0 : index
    %11 = vector.load %arg3[%c0_3, %c0_4] : memref<1x32xf32, #tpu.memory_space<vmem>>, vector<1x32xf32>
    %12 = vector.broadcast %11 : vector<1x32xf32> to vector<16x32xf32>
    %13 = arith.mulf %10, %12 : vector<16x32xf32>
    %c0_5 = arith.constant 0 : index
    %c0_6 = arith.constant 0 : index
    %14 = vector.load %arg4[%c0_5, %c0_6] : memref<32x128xf32, #tpu.memory_space<vmem>>, vector<32x128xf32>
    %cst_7 = arith.constant dense<0.000000e+00> : vector<16x128xf32>
    %15 = tpu.matmul %13, %14, %cst_7 {dimension_numbers = #tpu.dot_dimension_numbers<[1], [0], [0], [1], [0, 0, 1, 1], [], []>} : vector<16x32xf32>, vector<32x128xf32>, vector<16x128xf32> -> vector<16x128xf32>
    %c0_8 = arith.constant 0 : index
    %c0_9 = arith.constant 0 : index
    %16 = vector.load %arg5[%c0_8, %c0_9] : memref<1x128xf32, #tpu.memory_space<vmem>>, vector<1x128xf32>
    %17 = vector.broadcast %16 : vector<1x128xf32> to vector<16x128xf32>
    %18 = arith.addf %15, %17 : vector<16x128xf32>
    %c0_10 = arith.constant 0 : index
    %c0_11 = arith.constant 0 : index
    %19 = vector.load %arg6[%c0_10, %c0_11] : memref<16x128xf32, #tpu.memory_space<vmem>>, vector<16x128xf32>
    tpu.vector_store %arg6[%c0_10, %c0_11], %18 {strides = array<i32>} : memref<16x128xf32, #tpu.memory_space<vmem>>, vector<16x128xf32>,
    return
  }
  func.func @transform_0(%arg0: i32, %arg1: i32) -> (i32, i32) {
    %c0_i32 = arith.constant 0 : i32
    %c0_i32_0 = arith.constant 0 : i32
    return %arg1, %c0_i32 : i32, i32
  }
  func.func @transform_1(%arg0: i32, %arg1: i32) -> (i32, i32) {
    %c0_i32 = arith.constant 0 : i32
    %c0_i32_0 = arith.constant 0 : i32
    %c0_i32_1 = arith.constant 0 : i32
    return %c0_i32, %c0_i32_0 : i32, i32
  }
  func.func @transform_2(%arg0: i32, %arg1: i32) -> (i32, i32) {
    %c0_i32 = arith.constant 0 : i32
    %c0_i32_0 = arith.constant 0 : i32
    return %c0_i32, %arg0 : i32, i32
  }
  func.func @transform_3(%arg0: i32, %arg1: i32) -> (i32, i32) {
    %c0_i32 = arith.constant 0 : i32
    %c0_i32_0 = arith.constant 0 : i32
    return %c0_i32, %arg0 : i32, i32
  }
  func.func @transform_4(%arg0: i32, %arg1: i32) -> (i32, i32) {
    %c0_i32 = arith.constant 0 : i32
    return %arg1, %arg0 : i32, i32
  }
}

</mosaic_0001>

<llo_original>
// kernel: rmsnorm_linear.1
$region0: #{rmsnorm_linear.1}
  #allocation0 [shape = 'u32[]', space=smem, size = 0x4, offset = 0x4, fixed_abs, tag = 'smem constant byte address 0x4 - core index']
  #allocation1 [shape = 'u32[72,128]{1,0:T(1,128)}', space=vmem, size = 0x9000, scoped, tag = 'internal scratch']
  %s0 = inlined_call_operand.vmem [shape: f32[16,32], index: 0, kind: input, shape index: {}]
  %s1 = inlined_call_operand.vmem [shape: f32[1,32], index: 1, kind: input, shape index: {}]
  %s2 = inlined_call_operand.vmem [shape: f32[32,128], index: 2, kind: input, shape index: {}]
  %s3 = inlined_call_operand.vmem [shape: f32[1,128], index: 3, kind: input, shape index: {}]
  %s4 = inlined_call_operand.vmem [shape: f32[16,128], index: 4, kind: output, shape index: {}]
  %s5 = sld [smem:[#allocation0]]
  $region26: #{rmsnorm_linear.1} parent=0
    _
  %s7 = ssub.s32 1, %s5
  %s8 = scalar_select 0, %s7, %s5
  // Predicated region
  $region2: #{rmsnorm_linear.1} parent=0 // pred_check
    _
  $region3: #{rmsnorm_linear.1} parent=0 // pred_check_branch
    %10 = sbr.rel (0) target = $region5
  $region4: #{rmsnorm_linear.1} parent=0 // pred_region
    _
  $region5: #{rmsnorm_linear.1} parent=0 // pred_fallthru
    _
  // Predicated region
  $region6: #{rmsnorm_linear.1} parent=0 // pred_check
    _
  $region7: #{rmsnorm_linear.1} parent=0 // pred_check_branch
    %12 = sbr.rel (0) target = $region9
  $region8: #{rmsnorm_linear.1} parent=0 // pred_region
    _
  $region9: #{rmsnorm_linear.1} parent=0 // pred_fallthru
    _
  // Predicated region
  $region10: #{rmsnorm_linear.1} parent=0 // pred_check
    _
  $region11: #{rmsnorm_linear.1} parent=0 // pred_check_branch
    %14 = sbr.rel (0) target = $region13
  $region12: #{rmsnorm_linear.1} parent=0 // pred_region
    _
  $region13: #{rmsnorm_linear.1} parent=0 // pred_fallthru
    _
  // Predicated region
  $region14: #{rmsnorm_linear.1} parent=0 // pred_check
    _
  $region15: #{rmsnorm_linear.1} parent=0 // pred_check_branch
    %16 = sbr.rel (0) target = $region17
  $region16: #{rmsnorm_linear.1} parent=0 // pred_region
    _
  $region17: #{rmsnorm_linear.1} parent=0 // pred_fallthru
    _
  %v17 = vld [vmem:[%s0] sm:$0xff]
  %v18 = vld [vmem:[%s0 + $0x8] sm:$0xff]
  %v19 = vmul.f32 %v17, %v17
  %v20 = vmul.f32 %v18, %v18
  %vm21 = vcmask 261120
  %v22 = vsel %vm21, %v19, 0.0
  %23 = vadd.xlane.f32.xlu0 %v22
  %v24 = vpop.xlane.xlu0 %23
  %v25 = vsel %vm21, %v20, 0.0
  %26 = vadd.xlane.f32.xlu0 %v25
  %v27 = vpop.xlane.xlu0 %26
  %v28 = vmul.f32 %v24, 0.03125
  %v29 = vmul.f32 %v27, 0.03125
  %v30 = vadd.f32 %v28, 1.1920929e-07
  %v31 = vadd.f32 %v29, 1.1920929e-07
  %v32 = vrsqrt.pop %v30
  %v33 = vmul.f32 %v32, %v30
  %v34 = vmul.f32 %v33, %v32
  %v35 = vmul.f32 0.5, %v34
  %v36 = vsub.f32 1.5, %v35
  %v37 = vmul.f32 %v32, %v36
  %vm38 = vweird.f32 %v30
  %vm39 = vweird.f32 %v32
  %vm40 = vmor %vm38, %vm39
  %v41 = vsel %vm40, %v32, %v37
  %v42 = vrsqrt.pop %v31
  %v43 = vmul.f32 %v42, %v31
  %v44 = vmul.f32 %v43, %v42
  %v45 = vmul.f32 0.5, %v44
  %v46 = vsub.f32 1.5, %v45
  %v47 = vmul.f32 %v42, %v46
  %vm48 = vweird.f32 %v31
  %vm49 = vweird.f32 %v42
  %vm50 = vmor %vm48, %vm49
  %v51 = vsel %vm50, %v42, %v47
  %v52 = vmul.f32 %v17, %v41
  %v53 = vmul.f32 %v18, %v51
  %v54 = vld [vmem:[%s1] sm:$0x1]
  %v56 = vperm.slane %v54, 0
  %v58 = vmul.f32 %v52, %v56
  %v59 = vmul.f32 %v53, %v56
  %v60 = vld [vmem:[%s2] sm:$0xff]
  %v61 = vld [vmem:[%s2 + $0x8] sm:$0xff]
  %v62 = vld [vmem:[%s2 + $0x10] sm:$0xff]
  %v63 = vld [vmem:[%s2 + $0x18] sm:$0xff]
  %v64 = vld [vmem:[%s3] sm:$0x1]
  %v66 = vperm.slane %v64, 0
  %v69 = vsel %vm21, %v58, 0
  %v72 = vsel %vm21, %v59, 0
  %74 = vmatpush.msra.mxu0 0.0
  %75 = vmatpush.msra.mxu0 0.0
  %76 = vmatpush.msra.mxu0 0.0
  %77 = vmatpush.msra.mxu0 0.0
  %78 = vmatpush.msra.mxu0 0.0
  %79 = vmatpush.msra.mxu0 0.0
  %80 = vmatpush.msra.mxu0 0.0
  %81 = vmatpush.msra.mxu0 0.0
  %82 = vmatpush.msra.mxu0 0.0
  %83 = vmatpush.msra.mxu0 0.0
  %84 = vmatpush.msra.mxu0 0.0
  %85 = vmatpush.msra.mxu0 0.0
  %86 = vmatpush.msra.mxu0 %v63
  %87 = vmatpush.msra.mxu0 %v62
  %88 = vmatpush.msra.mxu0 %v61
  %89 = vmatpush.msra.mxu0 %v60
  %90 = vmatmul.f32.gmra.mxu0 %v69
  %v91 = vpop.f32.mrf.mxu0
  %v92 = vadd.f32 %v66, %v91
  %93 = vmatmul.f32.gmra.mxu0 %v72
  %v94 = vpop.f32.mrf.mxu0
  %v95 = vadd.f32 %v66, %v94
  %96 = vdwg.mxu0
  %97 = vst [vmem:[%s4] sm:$0xff] %v92
  %98 = vst [vmem:[%s4 + $0x8] sm:$0xff] %v95
  // Predicated region
  $region18: #{rmsnorm_linear.1} parent=0 // pred_check
    _
  $region19: #{rmsnorm_linear.1} parent=0 // pred_check_branch
    %100 = sbr.rel (0) target = $region21
  $region20: #{rmsnorm_linear.1} parent=0 // pred_region
    _
  $region21: #{rmsnorm_linear.1} parent=0 // pred_fallthru
    _
  // Predicated region
  $region22: #{rmsnorm_linear.1} parent=0 // pred_check
    _
  $region23: #{rmsnorm_linear.1} parent=0 // pred_check_branch
    %102 = sbr.rel (0) target = $region25
  $region24: #{rmsnorm_linear.1} parent=0 // pred_region
    _
  $region25: #{rmsnorm_linear.1} parent=0 // pred_fallthru
    _

</llo_original>
